<compile_context>
chip_gen: v7x
topology: tpu7x:2x2x1
jax: 0.10.0
libtpu: 0.0.40
codegen_flags: <defaults>
</compile_context>

<pallas_src>
import functools

import jax
import jax.numpy as jnp
from jax.experimental import pallas as pl
from jax.experimental.pallas import tpu as pltpu

LANE = 128
SUBLANE = 8


def _kl_sum_kernel(temp_ref, sm_ref, out_ref, *, scale):
    """Whole-slab KL term + full reduce; out_ref is a (1,1) f32 in SMEM."""
    t = temp_ref[...]
    s = sm_ref[...]
    # t * (log t - log s): logs go to the EUP slot, subtract/mul on the VPU.
    val = t * (jnp.log(t) - jnp.log(s))
    out_ref[0, 0] = jnp.sum(val) * scale


@jax.jit
def constrain_loss(crf_sm_mask, sm_mask):
    """Pallas implementation of ConstrainLossLayer.forward."""
    num_pixel = 41 * 41                       # hard-coded in the PyTorch module
    batch = sm_mask.shape[0]
    scale = 1.0 / (num_pixel * batch)         # folded into the kernel epilogue

    t = crf_sm_mask.astype(jnp.float32).reshape(-1)
    s = sm_mask.astype(jnp.float32).reshape(-1)
    n = t.shape[0]

    # Pad to a full (8,128)-tiled slab; pad value 1.0 is a no-op for the sum.
    elems_per_tile = SUBLANE * LANE
    padded = ((n + elems_per_tile - 1) // elems_per_tile) * elems_per_tile
    pad = padded - n
    t = jnp.pad(t, (0, pad), constant_values=1.0)
    s = jnp.pad(s, (0, pad), constant_values=1.0)

    rows = padded // LANE
    t2 = t.reshape(rows, LANE)
    s2 = s.reshape(rows, LANE)

    # Single invocation: whole slab as one block per operand (~56 KiB each for
    # the test shape, well under VMEM on every generation incl. v7x).
    out = pl.pallas_call(
        functools.partial(_kl_sum_kernel, scale=scale),
        out_shape=jax.ShapeDtypeStruct((1, 1), jnp.float32),
        in_specs=[
            pl.BlockSpec(memory_space=pltpu.VMEM),
            pl.BlockSpec(memory_space=pltpu.VMEM),
        ],
        out_specs=pl.BlockSpec(memory_space=pltpu.SMEM),
    )(t2, s2)

    return out[0, 0]


if __name__ == "__main__":
    key = jax.random.PRNGKey(0)
    k1, k2 = jax.random.split(key)

    # Shapes consistent with the module: 41x41 spatial maps, small batch/channels.
    B, C, H, W = 2, 4, 41, 41
    # Strictly positive values (probability-map-like) so log() is well defined.
    crf_sm_mask = jax.random.uniform(k1, (B, C, H, W), jnp.float32,
                                     minval=0.1, maxval=1.0)
    sm_mask = jax.random.uniform(k2, (B, C, H, W), jnp.float32,
                                 minval=0.1, maxval=1.0)

    out = constrain_loss(crf_sm_mask, sm_mask)
    out = jax.block_until_ready(out)

    # Pure-JAX reference check (same math as the PyTorch forward).
    ref = (crf_sm_mask * jnp.log(crf_sm_mask / sm_mask)).sum() / (41 * 41) / B
    assert jnp.allclose(out, ref, rtol=1e-5, atol=1e-5), (out, ref)

    print("KERNEL_OK")
</pallas_src>

<mosaic_0001>
module attributes {stable_mosaic.version = 11 : i64} {
  func.func @_kl_sum_kernel(%arg0: memref<112x128xf32, #tpu.memory_space<vmem>>, %arg1: memref<112x128xf32, #tpu.memory_space<vmem>>, %arg2: memref<1x1xf32, #tpu.memory_space<smem>>) attributes {dimension_semantics = [], scalar_prefetch = 0 : i64, scratch_operands = 0 : i64, tpu.core_type = #tpu.core_type<tc>} {
    %c0 = arith.constant 0 : index
    %c0_0 = arith.constant 0 : index
    %0 = vector.load %arg0[%c0, %c0_0] : memref<112x128xf32, #tpu.memory_space<vmem>>, vector<112x128xf32>
    %c0_1 = arith.constant 0 : index
    %c0_2 = arith.constant 0 : index
    %1 = vector.load %arg1[%c0_1, %c0_2] : memref<112x128xf32, #tpu.memory_space<vmem>>, vector<112x128xf32>
    %2 = math.log %0 : vector<112x128xf32>
    %3 = math.log %1 : vector<112x128xf32>
    %4 = arith.subf %2, %3 : vector<112x128xf32>
    %5 = arith.mulf %0, %4 : vector<112x128xf32>
    %6 = vector.shape_cast %5 : vector<112x128xf32> to vector<1x112x128xf32>
    %cst = arith.constant dense<0.000000e+00> : vector<1xf32>
    %7 = vector.multi_reduction <add>, %6, %cst [1, 2] : vector<1x112x128xf32> to vector<1xf32>
    %8 = vector.shape_cast %7 : vector<1xf32> to vector<1x1x1xf32>
    %9 = vector.extract %8[0, 0, 0] : f32 from vector<1x1x1xf32>
    %cst_3 = arith.constant 2.974420e-04 : f32
    %10 = arith.mulf %9, %cst_3 : f32
    %c0_4 = arith.constant 0 : index
    %c0_5 = arith.constant 0 : index
    %11 = memref.load %arg2[%c0_4, %c0_5] : memref<1x1xf32, #tpu.memory_space<smem>>
    memref.store %10, %arg2[%c0_4, %c0_5] : memref<1x1xf32, #tpu.memory_space<smem>>
    return
  }
}

</mosaic_0001>

<llo_original>
// kernel: constrain_loss.1
$region0: #{constrain_loss.1}
  #allocation0 [shape = 'u32[]', space=smem, size = 0x4, offset = 0x4, fixed_abs, tag = 'smem constant byte address 0x4 - core index']
  #allocation1 [shape = 'u32[144,128]{1,0:T(1,128)}', space=vmem, size = 0x12000, scoped, tag = 'internal scratch']
  %s0 = inlined_call_operand.vmem [shape: f32[112,128], index: 0, kind: input, shape index: {}]
  %s1 = inlined_call_operand.vmem [shape: f32[112,128], index: 1, kind: input, shape index: {}]
  %s2 = inlined_call_operand.hbm [shape: f32[1,1], index: 2, kind: output, shape index: {}]
  %s3 = sld [smem:[#allocation0]]
  $region18: #{constrain_loss.1} parent=0
    _
  %s5 = ssub.s32 1, %s3
  %s6 = scalar_select 0, %s5, %s3
  $region1: #{constrain_loss.1} parent=0
    #allocation2 [shape = 'u8[512]{0}', space=smem, size = 0x200, scoped, tag = 'output window, operand 0, single buffered']
    #allocation3 [shape = 's32[1]{0}', space=sflag, size = 0x4, scoped, tag = 'scoped memory for constrain_loss.1']
    %7 = vsyncpa [#allocation3], 0
    // Predicated region
    $region2: #{constrain_loss.1} parent=1 // pred_check
      _
    $region3: #{constrain_loss.1} parent=1 // pred_check_branch
      %9 = sbr.rel (0) target = $region5
    $region4: #{constrain_loss.1} parent=1 // pred_region
      _
    $region5: #{constrain_loss.1} parent=1 // pred_fallthru
      _
    // Predicated region
    $region6: #{constrain_loss.1} parent=1 // pred_check
      _
    $region7: #{constrain_loss.1} parent=1 // pred_check_branch
      %11 = sbr.rel (0) target = $region9
    $region8: #{constrain_loss.1} parent=1 // pred_region
      _
    $region9: #{constrain_loss.1} parent=1 // pred_fallthru
      _
    %v12 = vld [vmem:[%s0] sm:$0xff]
    %v13 = vld [vmem:[%s0 + $0x8] sm:$0xff]
    %v14 = vld [vmem:[%s0 + $0x10] sm:$0xff]
    %v15 = vld [vmem:[%s0 + $0x18] sm:$0xff]
    %v16 = vld [vmem:[%s0 + $0x20] sm:$0xff]
    %v17 = vld [vmem:[%s0 + $0x28] sm:$0xff]
    %v18 = vld [vmem:[%s0 + $0x30] sm:$0xff]
    %v19 = vld [vmem:[%s0 + $0x38] sm:$0xff]
    %v20 = vld [vmem:[%s0 + $0x40] sm:$0xff]
    %v21 = vld [vmem:[%s0 + $0x48] sm:$0xff]
    %v22 = vld [vmem:[%s0 + $0x50] sm:$0xff]
    %v23 = vld [vmem:[%s0 + $0x58] sm:$0xff]
    %v24 = vld [vmem:[%s0 + $0x60] sm:$0xff]
    %v25 = vld [vmem:[%s0 + $0x68] sm:$0xff]
    %v26 = vld [vmem:[%s1] sm:$0xff]
    %v27 = vld [vmem:[%s1 + $0x8] sm:$0xff]
    %v28 = vld [vmem:[%s1 + $0x10] sm:$0xff]
    %v29 = vld [vmem:[%s1 + $0x18] sm:$0xff]
    %v30 = vld [vmem:[%s1 + $0x20] sm:$0xff]
    %v31 = vld [vmem:[%s1 + $0x28] sm:$0xff]
    %v32 = vld [vmem:[%s1 + $0x30] sm:$0xff]
    %v33 = vld [vmem:[%s1 + $0x38] sm:$0xff]
    %v34 = vld [vmem:[%s1 + $0x40] sm:$0xff]
    %v35 = vld [vmem:[%s1 + $0x48] sm:$0xff]
    %v36 = vld [vmem:[%s1 + $0x50] sm:$0xff]
    %v37 = vld [vmem:[%s1 + $0x58] sm:$0xff]
    %v38 = vld [vmem:[%s1 + $0x60] sm:$0xff]
    %v39 = vld [vmem:[%s1 + $0x68] sm:$0xff]
    %v40 = vlog2.pop %v12
    %v41 = vmul.f32 %v40, 0.6931472
    %v42 = vlog2.pop %v13
    %v43 = vmul.f32 %v42, 0.6931472
    %v44 = vlog2.pop %v14
    %v45 = vmul.f32 %v44, 0.6931472
    %v46 = vlog2.pop %v15
    %v47 = vmul.f32 %v46, 0.6931472
    %v48 = vlog2.pop %v16
    %v49 = vmul.f32 %v48, 0.6931472
    %v50 = vlog2.pop %v17
    %v51 = vmul.f32 %v50, 0.6931472
    %v52 = vlog2.pop %v18
    %v53 = vmul.f32 %v52, 0.6931472
    %v54 = vlog2.pop %v19
    %v55 = vmul.f32 %v54, 0.6931472
    %v56 = vlog2.pop %v20
    %v57 = vmul.f32 %v56, 0.6931472
    %v58 = vlog2.pop %v21
    %v59 = vmul.f32 %v58, 0.6931472
    %v60 = vlog2.pop %v22
    %v61 = vmul.f32 %v60, 0.6931472
    %v62 = vlog2.pop %v23
    %v63 = vmul.f32 %v62, 0.6931472
    %v64 = vlog2.pop %v24
    %v65 = vmul.f32 %v64, 0.6931472
    %v66 = vlog2.pop %v25
    %v67 = vmul.f32 %v66, 0.6931472
    %v68 = vlog2.pop %v26
    %v69 = vmul.f32 %v68, 0.6931472
    %v70 = vlog2.pop %v27
    %v71 = vmul.f32 %v70, 0.6931472
    %v72 = vlog2.pop %v28
    %v73 = vmul.f32 %v72, 0.6931472
    %v74 = vlog2.pop %v29
    %v75 = vmul.f32 %v74, 0.6931472
    %v76 = vlog2.pop %v30
    %v77 = vmul.f32 %v76, 0.6931472
    %v78 = vlog2.pop %v31
    %v79 = vmul.f32 %v78, 0.6931472
    %v80 = vlog2.pop %v32
    %v81 = vmul.f32 %v80, 0.6931472
    %v82 = vlog2.pop %v33
    %v83 = vmul.f32 %v82, 0.6931472
    %v84 = vlog2.pop %v34
    %v85 = vmul.f32 %v84, 0.6931472
    %v86 = vlog2.pop %v35
    %v87 = vmul.f32 %v86, 0.6931472
    %v88 = vlog2.pop %v36
    %v89 = vmul.f32 %v88, 0.6931472
    %v90 = vlog2.pop %v37
    %v91 = vmul.f32 %v90, 0.6931472
    %v92 = vlog2.pop %v38
    %v93 = vmul.f32 %v92, 0.6931472
    %v94 = vlog2.pop %v39
    %v95 = vmul.f32 %v94, 0.6931472
    %v96 = vsub.f32 %v41, %v69
    %v97 = vsub.f32 %v43, %v71
    %v98 = vsub.f32 %v45, %v73
    %v99 = vsub.f32 %v47, %v75
    %v100 = vsub.f32 %v49, %v77
    %v101 = vsub.f32 %v51, %v79
    %v102 = vsub.f32 %v53, %v81
    %v103 = vsub.f32 %v55, %v83
    %v104 = vsub.f32 %v57, %v85
    %v105 = vsub.f32 %v59, %v87
    %v106 = vsub.f32 %v61, %v89
    %v107 = vsub.f32 %v63, %v91
    %v108 = vsub.f32 %v65, %v93
    %v109 = vsub.f32 %v67, %v95
    %v110 = vmul.f32 %v12, %v96
    %v111 = vmul.f32 %v13, %v97
    %v112 = vmul.f32 %v14, %v98
    %v113 = vmul.f32 %v15, %v99
    %v114 = vmul.f32 %v16, %v100
    %v115 = vmul.f32 %v17, %v101
    %v116 = vmul.f32 %v18, %v102
    %v117 = vmul.f32 %v19, %v103
    %v118 = vmul.f32 %v20, %v104
    %v119 = vmul.f32 %v21, %v105
    %v120 = vmul.f32 %v22, %v106
    %v121 = vmul.f32 %v23, %v107
    %v122 = vmul.f32 %v24, %v108
    %v123 = vmul.f32 %v25, %v109
    %v124 = vadd.f32 %v110, %v111
    %v125 = vadd.f32 %v124, %v112
    %v126 = vadd.f32 %v125, %v113
    %v127 = vadd.f32 %v126, %v114
    %v128 = vadd.f32 %v127, %v115
    %v129 = vadd.f32 %v128, %v116
    %v130 = vadd.f32 %v129, %v117
    %v131 = vadd.f32 %v130, %v118
    %v132 = vadd.f32 %v131, %v119
    %v133 = vadd.f32 %v132, %v120
    %v134 = vadd.f32 %v133, %v121
    %v135 = vadd.f32 %v134, %v122
    %v136 = vadd.f32 %v135, %v123
    %137 = vadd.xlane.f32.xlu0 %v136
    %v138 = vpop.xlane.xlu0 %137
    %v139 = vrot.slane %v138, 4
    %v140 = vadd.f32 %v138, %v139
    %v141 = vrot.slane %v140, 2
    %v142 = vadd.f32 %v140, %v141
    %v143 = vrot.slane %v142, 1
    %v144 = vadd.f32 %v142, %v143
    %s145 = vtos %v144
    %s146 = smul.f32 %s145, 0.000297442
    %s147 = scalar_lea.smem [#allocation2], 0
    %148 = sst [smem:[%s147]] %s146
    // Predicated region
    $region10: #{constrain_loss.1} parent=1 // pred_check
      _
    $region11: #{constrain_loss.1} parent=1 // pred_check_branch
      %150 = sbr.rel (0) target = $region13
    $region12: #{constrain_loss.1} parent=1 // pred_region
      %s152 = ssub.s32 16, 16
      %153 = vsyncadd [#allocation3], %s152
      %156 = dma.smem_to_hbm [#allocation2], 16, %s2, [#allocation3]
    $region13: #{constrain_loss.1} parent=1 // pred_fallthru
      _
    // Predicated region
    $region14: #{constrain_loss.1} parent=1 // pred_check
      _
    $region15: #{constrain_loss.1} parent=1 // pred_check_branch
      %158 = sbr.rel (0) target = $region17
    $region16: #{constrain_loss.1} parent=1 // pred_region
      %159 = dma.done [#allocation3], 16
    $region17: #{constrain_loss.1} parent=1 // pred_fallthru
      _
    %160 = sfence
    %161 = vsyncpa [#allocation3], 1

</llo_original>
